<compile_context>
chip_gen: v6e
topology: v6e:2x2x1
jax: 0.10.0
libtpu: 0.0.40
codegen_flags: <defaults>
</compile_context>

<pallas_src>
import math

import jax
import jax.numpy as jnp
from jax.experimental import pallas as pl
from jax.experimental.pallas import tpu as pltpu


def _make_dma_copy_kernel(n_chunks: int, chunk_rows: int):
    """HBM->HBM copy: start up to `n_chunks` DMAs, then wait on all of them."""

    def kernel(x_ref, o_ref, sems):
        if n_chunks == 1:
            cp = pltpu.make_async_copy(x_ref, o_ref, sems.at[0])
            cp.start()
            cp.wait()
            return
        copies = [
            pltpu.make_async_copy(
                x_ref.at[pl.ds(c * chunk_rows, chunk_rows), :],
                o_ref.at[pl.ds(c * chunk_rows, chunk_rows), :],
                sems.at[c],
            )
            for c in range(n_chunks)
        ]
        for cp in copies:          # issue all DMAs (multiple engines in flight)
            cp.start()
        for cp in copies:          # then drain
            cp.wait()

    return kernel


def flatten(x: jax.Array, *, force_copy: bool = False) -> jax.Array:
    """Equivalent of the module's forward: x.view(x.size(0), -1).

    Default: metadata-only reshape (free).  force_copy=True materializes a
    fresh HBM buffer via a pure DMA Pallas kernel (no VMEM/vreg round trip).
    """
    B = x.shape[0]
    F = math.prod(x.shape[1:]) if x.ndim > 1 else 1
    out_shape = (B, F)

    # Metadata-only view; exactly matches torch .view on a contiguous tensor.
    y = jnp.reshape(x, out_shape)
    if not force_copy or B * F == 0:
        return y

    # Chunk along the batch axis only when every chunk keeps 8-row (sublane)
    # alignment; otherwise a single whole-array DMA is both simplest and fast.
    n_chunks, chunk_rows = 1, B
    for cand in (8, 4, 2):
        if B % cand == 0 and (B // cand) % 8 == 0:
            n_chunks, chunk_rows = cand, B // cand
            break

    return pl.pallas_call(
        _make_dma_copy_kernel(n_chunks, chunk_rows),
        out_shape=jax.ShapeDtypeStruct(out_shape, x.dtype),
        in_specs=[pl.BlockSpec(memory_space=pl.ANY)],
        out_specs=pl.BlockSpec(memory_space=pl.ANY),
        scratch_shapes=[pltpu.SemaphoreType.DMA((n_chunks,))],
    )(y)


if __name__ == "__main__":
    key = jax.random.PRNGKey(0)
    k0, k1, k2 = jax.random.split(key, 3)

    # Primary case: small NCHW activation as the module would see post-conv.
    x = jax.random.normal(k0, (2, 4, 16, 16), dtype=jnp.float32)
    y = flatten(x)                               # metadata-only fast path
    jax.block_until_ready(y)
    assert y.shape == (2, 4 * 16 * 16), y.shape
    assert jnp.array_equal(y, jnp.reshape(x, (2, -1)))

    # Exercise the Pallas DMA-copy kernel (single whole-array DMA).
    y_copy = flatten(x, force_copy=True)
    jax.block_until_ready(y_copy)
    assert y_copy.shape == (2, 4 * 16 * 16), y_copy.shape
    assert jnp.array_equal(y_copy, jnp.reshape(x, (2, -1)))

    # Larger batch: exercises the multi-chunk (2 x 8-row) DMA path.
    x_big = jax.random.normal(k1, (16, 8, 32, 32), dtype=jnp.float32)
    y_big = flatten(x_big, force_copy=True)
    jax.block_until_ready(y_big)
    assert y_big.shape == (16, 8 * 32 * 32), y_big.shape
    assert jnp.array_equal(y_big, jnp.reshape(x_big, (16, -1)))

    # Odd / unaligned element count: default reshape path, exact match.
    x_odd = jax.random.normal(k2, (3, 5, 7), dtype=jnp.float32)
    y_odd = flatten(x_odd)
    jax.block_until_ready(y_odd)
    assert y_odd.shape == (3, 35), y_odd.shape
    assert jnp.array_equal(y_odd, jnp.reshape(x_odd, (3, -1)))

    print("KERNEL_OK")
</pallas_src>

<mosaic_0001>
module attributes {stable_mosaic.version = 11 : i64} {
  func.func @kernel(%arg0: memref<2x1024xf32, #tpu.memory_space<any>>, %arg1: memref<2x1024xf32, #tpu.memory_space<any>>, %arg2: memref<1x!tpu.dma_semaphore, #tpu.memory_space<semaphore_mem>>) attributes {dimension_semantics = [], scalar_prefetch = 0 : i64, scratch_operands = 1 : i64, tpu.core_type = #tpu.core_type<tc>} {
    %c0_i32 = arith.constant 0 : i32
    %0 = tpu.memref_slice %arg2[%c0_i32] : memref<1x!tpu.dma_semaphore, #tpu.memory_space<semaphore_mem>> -> memref<1x!tpu.dma_semaphore, #tpu.memory_space<semaphore_mem>>
    %1 = tpu.memref_squeeze %0 : memref<1x!tpu.dma_semaphore, #tpu.memory_space<semaphore_mem>> -> memref<!tpu.dma_semaphore, #tpu.memory_space<semaphore_mem>>
    tpu.enqueue_dma source(%arg0 : memref<2x1024xf32, #tpu.memory_space<any>>) target(%arg1 : memref<2x1024xf32, #tpu.memory_space<any>>) target_semaphore(%1 : memref<!tpu.dma_semaphore, #tpu.memory_space<semaphore_mem>>)
    %c0_i32_0 = arith.constant 0 : i32
    %2 = tpu.memref_slice %arg2[%c0_i32_0] : memref<1x!tpu.dma_semaphore, #tpu.memory_space<semaphore_mem>> -> memref<1x!tpu.dma_semaphore, #tpu.memory_space<semaphore_mem>>
    %3 = tpu.memref_squeeze %2 : memref<1x!tpu.dma_semaphore, #tpu.memory_space<semaphore_mem>> -> memref<!tpu.dma_semaphore, #tpu.memory_space<semaphore_mem>>
    tpu.wait_dma2 semaphore(%3 : memref<!tpu.dma_semaphore, #tpu.memory_space<semaphore_mem>>) src(%arg0 : memref<2x1024xf32, #tpu.memory_space<any>>) dst(%arg1 : memref<2x1024xf32, #tpu.memory_space<any>>)
    return
  }
}

</mosaic_0001>

<llo_original>
// kernel: tpu_custom_call.1
$region0: #{tpu_custom_call.1}
  #allocation0 [shape = 'u32[]', space=smem, size = 0x4, offset = 0x4, fixed_abs, tag = 'smem constant byte address 0x4 - core index']
  #allocation1 [shape = 'u32[144,128]{1,0:T(1,128)}', space=vmem, size = 0x12000, scoped, tag = 'internal scratch']
  #allocation2 [shape = 's32[1]{0}', space=sflag, size = 0x4, scoped, tag = 'scratch operand']
  #allocation3 [shape = 's32[]', space=sflag, size = 0x4, offset = 0, fixed_abs, tag = 'sflag constant byte address 0x0 - dummy sync flag']
  #allocation4 [shape = 'u32[0]{0}', space=smem, size = 0, offset = 0, fixed_abs, tag = 'smem constant byte address 0x0 - null']
  %s0 = inlined_call_operand.hbm [shape: f32[2,1024], index: 0, kind: input, shape index: {}]
  %s1 = inlined_call_operand.hbm [shape: f32[2,1024], index: 1, kind: output, shape index: {}]
  %s2 = sld [smem:[#allocation0]]
  $region2: #{tpu_custom_call.1} parent=0
    _
  %s4 = ssub.s32 1, %s2
  %s5 = scalar_select 0, %s4, %s2
  %s7 = sshll.u32 1, 14
  %s8 = sxor.u32 4294967295, %s7
  %12 = dma.general %s0, 256, %s1, [#allocation2], 131072, [#allocation4], 0, 0
  %s13 = smul.u32 2, 1
  %s14 = smul.u32 %s13, 8
  %s15 = sshll.u32 %s14, 4
  %16 = dma.done [#allocation2], %s15
  %17 = vsyncmov [#allocation2]
  %s18 = vpop.sfrf %17
  %p19 = scmp.eq.s32.totalorder %s18, 0
  %p20 = pneg %p19
  %22 = shalt.err (%p20)

</llo_original>
